<compile_context>
chip_gen: v6e
topology: v6e:2x2x1
jax: 0.10.0
libtpu: 0.0.40
codegen_flags: <defaults>
</compile_context>

<pallas_src>
import math
import functools

import jax
import jax.numpy as jnp
from jax.experimental import pallas as pl
from jax.experimental.pallas import tpu as pltpu


# ----------------------------------------------------------------------------
# Tiling helpers
# ----------------------------------------------------------------------------

_TM_PREF = 256          # row tile (second-minor, 8-aligned)
_TN_PREF = 256          # output-col tile (lane dim, 256 keeps v6e 2x256 MXU full)
_TK_PREF = 512          # contraction tile (lane dim of the x block)
_VMEM_LIMIT = 48 * 1024 * 1024   # explicit scoped-VMEM limit with headroom for v7x (64 MiB)


def _pick_tile(dim, pref, align):
    """Largest `align`-aligned divisor of `dim` that is <= pref, else the full dim."""
    if dim <= pref:
        return dim
    t = (pref // align) * align
    while t >= align:
        if dim % t == 0:
            return t
        t -= align
    return dim


# ----------------------------------------------------------------------------
# Pallas kernels
# ----------------------------------------------------------------------------

def _matmul_bias_kernel(x_ref, w_ref, b_ref, o_ref, acc_ref, *, relu):
    # Tiled out[i,j] = act(sum_k x[i,k] @ w[k,j] + b[j]); bias only on last K step.
    @pl.when(pl.program_id(2) == 0)
    def _():
        acc_ref[...] = jnp.zeros_like(acc_ref)

    acc_ref[...] += jnp.dot(x_ref[...].astype(jnp.bfloat16), w_ref[...],
                            preferred_element_type=jnp.float32)

    @pl.when(pl.program_id(2) == pl.num_programs(2) - 1)
    def _():
        r = acc_ref[...] + b_ref[...]
        if relu:
            r = jnp.maximum(r, 0.0)
        o_ref[...] = r


def _matmul_bias_res_ln_kernel(x_ref, w_ref, b_ref, res_ref, g_ref, be_ref,
                               o_ref, acc_ref):
    # Fused: out = LayerNorm(res + (x @ w + b)) with gamma/beta, eps=1e-5.
    # Full output width per tile (LayerNorm needs the whole row); K tiled.
    @pl.when(pl.program_id(1) == 0)
    def _():
        acc_ref[...] = jnp.zeros_like(acc_ref)

    acc_ref[...] += jnp.dot(x_ref[...].astype(jnp.bfloat16), w_ref[...],
                            preferred_element_type=jnp.float32)

    @pl.when(pl.program_id(1) == pl.num_programs(1) - 1)
    def _():
        z = acc_ref[...] + b_ref[...] + res_ref[...]
        mean = jnp.mean(z, axis=-1, keepdims=True)
        var = jnp.mean((z - mean) ** 2, axis=-1, keepdims=True)
        zn = (z - mean) * jax.lax.rsqrt(var + 1e-5)
        o_ref[...] = zn * g_ref[...] + be_ref[...]


def _attention_kernel(q_ref, k_ref, v_ref, m_ref, o_ref, *, num_heads, scale):
    # One (batch, q-tile) step; all heads handled inside; output written
    # lane-dense in [tq, D] with heads packed along the last dim.
    q = q_ref[0]              # (tq, D) f32
    k = k_ref[0]              # (S,  D) f32
    v = v_ref[0]              # (S,  D) f32
    mask = m_ref[0]           # (1,  S) key-padding mask, 1.0 = attend
    d_model = q.shape[-1]
    hd = d_model // num_heads

    outs = []
    for h in range(num_heads):
        lo = h * hd
        qh = q[:, lo:lo + hd].astype(jnp.bfloat16)
        kh = k[:, lo:lo + hd].astype(jnp.bfloat16)
        vh = v[:, lo:lo + hd].astype(jnp.bfloat16)
        # Contract the last dims directly -> no explicit K transpose.
        s = jax.lax.dot_general(qh, kh, (((1,), (1,)), ((), ())),
                                preferred_element_type=jnp.float32) * scale
        s = jnp.where(mask > 0, s, -1e9)
        s = s - jnp.max(s, axis=-1, keepdims=True)
        p = jnp.exp(s)
        inv = pl.reciprocal(jnp.sum(p, axis=-1, keepdims=True), approx=True)
        p = p * inv
        outs.append(jnp.dot(p.astype(jnp.bfloat16), vh,
                            preferred_element_type=jnp.float32))
    # Heads packed back into the model dim -> single lane-dense store.
    o_ref[0] = jnp.concatenate(outs, axis=-1)


# ----------------------------------------------------------------------------
# Kernel wrappers
# ----------------------------------------------------------------------------

def matmul_bias(x2d, w, b, *, relu=False):
    M, K = x2d.shape
    _, N = w.shape
    tm = _pick_tile(M, _TM_PREF, 8)
    tn = _pick_tile(N, _TN_PREF, 128)
    tk = _pick_tile(K, _TK_PREF, 128)
    return pl.pallas_call(
        functools.partial(_matmul_bias_kernel, relu=relu),
        out_shape=jax.ShapeDtypeStruct((M, N), jnp.float32),
        grid=(M // tm, N // tn, K // tk),
        in_specs=[
            pl.BlockSpec((tm, tk), lambda i, j, k: (i, k)),
            pl.BlockSpec((tk, tn), lambda i, j, k: (k, j)),
            pl.BlockSpec((1, tn), lambda i, j, k: (0, j)),
        ],
        out_specs=pl.BlockSpec((tm, tn), lambda i, j, k: (i, j)),
        scratch_shapes=[pltpu.VMEM((tm, tn), jnp.float32)],
        compiler_params=pltpu.CompilerParams(
            dimension_semantics=("parallel", "parallel", "arbitrary"),
            vmem_limit_bytes=_VMEM_LIMIT),
    )(x2d, w, b.reshape(1, N))


def matmul_bias_residual_layernorm(x2d, w, b, res2d, gamma, beta):
    M, K = x2d.shape
    _, D = w.shape
    tm = _pick_tile(M, _TM_PREF, 8)
    tk = _pick_tile(K, _TK_PREF, 128)
    return pl.pallas_call(
        _matmul_bias_res_ln_kernel,
        out_shape=jax.ShapeDtypeStruct((M, D), jnp.float32),
        grid=(M // tm, K // tk),
        in_specs=[
            pl.BlockSpec((tm, tk), lambda i, k: (i, k)),
            pl.BlockSpec((tk, D), lambda i, k: (k, 0)),
            pl.BlockSpec((1, D), lambda i, k: (0, 0)),
            pl.BlockSpec((tm, D), lambda i, k: (i, 0)),
            pl.BlockSpec((1, D), lambda i, k: (0, 0)),
            pl.BlockSpec((1, D), lambda i, k: (0, 0)),
        ],
        out_specs=pl.BlockSpec((tm, D), lambda i, k: (i, 0)),
        scratch_shapes=[pltpu.VMEM((tm, D), jnp.float32)],
        compiler_params=pltpu.CompilerParams(
            dimension_semantics=("parallel", "arbitrary"),
            vmem_limit_bytes=_VMEM_LIMIT),
    )(x2d, w, b.reshape(1, D), res2d, gamma.reshape(1, D), beta.reshape(1, D))


def attention(q, k, v, mask3, num_heads, scale, *, tq_pref=256):
    # q/k/v: (B, S, D) with heads packed in the last dim; mask3: (B, 1, S).
    # TODO(synk): for very long S, tile keys flash-style (online softmax) too.
    B, S, D = q.shape
    tq = _pick_tile(S, tq_pref, 8)
    q_spec = pl.BlockSpec((1, tq, D), lambda b, i: (b, i, 0))
    kv_spec = pl.BlockSpec((1, S, D), lambda b, i: (b, 0, 0))
    return pl.pallas_call(
        functools.partial(_attention_kernel, num_heads=num_heads, scale=scale),
        out_shape=jax.ShapeDtypeStruct((B, S, D), jnp.float32),
        grid=(B, S // tq),
        in_specs=[q_spec, kv_spec, kv_spec,
                  pl.BlockSpec((1, 1, S), lambda b, i: (b, 0, 0))],
        out_specs=pl.BlockSpec((1, tq, D), lambda b, i: (b, i, 0)),
        compiler_params=pltpu.CompilerParams(
            dimension_semantics=("parallel", "parallel"),
            vmem_limit_bytes=_VMEM_LIMIT),
    )(q, k, v, mask3)


# ----------------------------------------------------------------------------
# Model (parameters + forward)
# ----------------------------------------------------------------------------

def position_encoding(seq_len, d_model):
    pos = jnp.arange(seq_len, dtype=jnp.float32)[:, None]
    i = jnp.arange(d_model, dtype=jnp.float32)[None, :]
    angle = pos / jnp.power(10000.0, (2.0 * jnp.floor(i / 2.0)) / d_model)
    return jnp.where(jnp.arange(d_model)[None, :] % 2 == 0,
                     jnp.sin(angle), jnp.cos(angle)).astype(jnp.float32)


def init_params(key, vocab, d_model, num_layers, d_ff):
    keys = jax.random.split(key, 1 + num_layers)
    params = {
        "embedding": jax.random.normal(keys[0], (vocab, d_model), jnp.float32) * 0.02,
        "layers": [],
    }

    def dense(k, din, dout):
        # weights stored bf16 for the MXU (accumulation stays f32 in-kernel)
        w = jax.random.normal(k, (din, dout), jnp.float32) / math.sqrt(din)
        return w.astype(jnp.bfloat16)

    for l in range(num_layers):
        lk = jax.random.split(keys[1 + l], 6)
        wq = dense(lk[0], d_model, d_model)
        wk = dense(lk[1], d_model, d_model)
        wv = dense(lk[2], d_model, d_model)
        params["layers"].append({
            "wqkv": jnp.concatenate([wq, wk, wv], axis=1),          # (D, 3D) bf16
            "bqkv": jnp.zeros((3 * d_model,), jnp.float32),
            "wo": dense(lk[3], d_model, d_model), "bo": jnp.zeros((d_model,), jnp.float32),
            "g1": jnp.ones((d_model,), jnp.float32), "be1": jnp.zeros((d_model,), jnp.float32),
            "w1": dense(lk[4], d_model, d_ff),     "b1": jnp.zeros((d_ff,), jnp.float32),
            "w2": dense(lk[5], d_ff, d_model),     "b2": jnp.zeros((d_model,), jnp.float32),
            "g2": jnp.ones((d_model,), jnp.float32), "be2": jnp.zeros((d_model,), jnp.float32),
        })
    return params


def encoder_layer_forward(x, lp, mask3, num_heads):
    B, S, D = x.shape
    hd = D // num_heads
    x2 = x.reshape(B * S, D)

    # ---- fused Q/K/V projection: one [M, D] x [D, 3D] matmul ----
    qkv = matmul_bias(x2, lp["wqkv"], lp["bqkv"])
    q = qkv[:, :D].reshape(B, S, D)
    k = qkv[:, D:2 * D].reshape(B, S, D)
    v = qkv[:, 2 * D:].reshape(B, S, D)

    # ---- multi-head attention, [B, S, D] lane-dense, heads inside kernel ----
    attn = attention(q, k, v, mask3, num_heads, 1.0 / math.sqrt(hd))

    # ---- output projection + bias + residual + LayerNorm1 (fused) ----
    x_n1 = matmul_bias_residual_layernorm(attn.reshape(B * S, D),
                                          lp["wo"], lp["bo"], x2,
                                          lp["g1"], lp["be1"])

    # ---- FFN: (matmul + bias + ReLU), then (matmul + bias + residual + LN2) ----
    h = matmul_bias(x_n1, lp["w1"], lp["b1"], relu=True)
    out = matmul_bias_residual_layernorm(h, lp["w2"], lp["b2"], x_n1,
                                         lp["g2"], lp["be2"])
    return out.reshape(B, S, D)


def transformer_encoder_forward(src_tokens, mask, params, d_model, num_heads):
    B, S = src_tokens.shape
    # Embedding gather + scale + positional add left to XLA (cheap one-shot
    # elementwise glue; not worth a standalone pallas_call per the perf review).
    emb = params["embedding"][src_tokens]                    # (B, S, D)
    pos = position_encoding(S, d_model)                      # (S, D)
    x = emb * math.sqrt(d_model) + pos[None, :, :]           # dropout = identity

    mask3 = mask.astype(jnp.float32).reshape(B, 1, S)        # key-padding mask
    for lp in params["layers"]:
        x = encoder_layer_forward(x, lp, mask3, num_heads)
    return x


# ----------------------------------------------------------------------------
# Demo
# ----------------------------------------------------------------------------

if __name__ == "__main__":
    B, S = 2, 8
    VOCAB = 50
    D_MODEL = 32
    NUM_HEADS = 4
    D_FF = 64
    NUM_LAYERS = 2

    key = jax.random.PRNGKey(0)
    kp, kt = jax.random.split(key)

    params = init_params(kp, VOCAB, D_MODEL, NUM_LAYERS, D_FF)
    src = jax.random.randint(kt, (B, S), 0, VOCAB, dtype=jnp.int32)
    mask = jnp.ones((B, S), dtype=jnp.float32)   # 1.0 = attend everywhere

    out = transformer_encoder_forward(src, mask, params, D_MODEL, NUM_HEADS)
    out = jax.block_until_ready(out)

    assert out.shape == (B, S, D_MODEL)
    assert bool(jnp.all(jnp.isfinite(out)))
    print("KERNEL_OK")
</pallas_src>

<mosaic_0001>
module attributes {stable_mosaic.version = 11 : i64} {
  func.func @_matmul_bias_kernel(%arg0: i32, %arg1: i32, %arg2: i32, %arg3: memref<16x32xf32, #tpu.memory_space<vmem>>, %arg4: memref<32x96xbf16, #tpu.memory_space<vmem>>, %arg5: memref<1x96xf32, #tpu.memory_space<vmem>>, %arg6: memref<16x96xf32, #tpu.memory_space<vmem>>, %arg7: memref<16x96xf32, #tpu.memory_space<vmem>>) attributes {dimension_semantics = [#tpu.dimension_semantics<parallel>, #tpu.dimension_semantics<parallel>, #tpu.dimension_semantics<arbitrary>], iteration_bounds = array<i64: 1, 1, 1>, scalar_prefetch = 0 : i64, scratch_operands = 1 : i64, tpu.core_type = #tpu.core_type<tc>, window_params = [{transform_indices = @transform_0, window_bounds = array<i64: 16, 32>}, {transform_indices = @transform_1, window_bounds = array<i64: 32, 96>}, {transform_indices = @transform_2, window_bounds = array<i64: 1, 96>}, {transform_indices = @transform_3, window_bounds = array<i64: 16, 96>}]} {
    %c0_i32 = arith.constant 0 : i32
    %0 = arith.cmpi eq, %arg2, %c0_i32 : i32
    %1 = arith.extui %0 : i1 to i32
    %c0_i32_0 = arith.constant 0 : i32
    %2 = arith.cmpi ne, %1, %c0_i32_0 : i32
    scf.if %2 {
      %cst_10 = arith.constant 0.000000e+00 : f32
      %13 = vector.broadcast %cst_10 : f32 to vector<16x96xf32>
      %c0_11 = arith.constant 0 : index
      %c0_12 = arith.constant 0 : index
      %14 = vector.load %arg7[%c0_11, %c0_12] : memref<16x96xf32, #tpu.memory_space<vmem>>, vector<16x96xf32>
      tpu.vector_store %arg7[%c0_11, %c0_12], %13 {strides = array<i32>} : memref<16x96xf32, #tpu.memory_space<vmem>>, vector<16x96xf32>,
    } else {
    }
    %c0 = arith.constant 0 : index
    %c0_1 = arith.constant 0 : index
    %3 = vector.load %arg7[%c0, %c0_1] : memref<16x96xf32, #tpu.memory_space<vmem>>, vector<16x96xf32>
    %c0_2 = arith.constant 0 : index
    %c0_3 = arith.constant 0 : index
    %4 = vector.load %arg3[%c0_2, %c0_3] : memref<16x32xf32, #tpu.memory_space<vmem>>, vector<16x32xf32>
    %5 = arith.truncf %4 : vector<16x32xf32> to vector<16x32xbf16>
    %c0_4 = arith.constant 0 : index
    %c0_5 = arith.constant 0 : index
    %6 = vector.load %arg4[%c0_4, %c0_5] : memref<32x96xbf16, #tpu.memory_space<vmem>>, vector<32x96xbf16>
    %cst = arith.constant dense<0.000000e+00> : vector<16x96xf32>
    %7 = tpu.matmul %5, %6, %cst {dimension_numbers = #tpu.dot_dimension_numbers<[1], [0], [0], [1], [0, 0, 1, 1], [], []>} : vector<16x32xbf16>, vector<32x96xbf16>, vector<16x96xf32> -> vector<16x96xf32>
    %8 = arith.addf %3, %7 : vector<16x96xf32>
    %c0_6 = arith.constant 0 : index
    %c0_7 = arith.constant 0 : index
    %9 = vector.load %arg7[%c0_6, %c0_7] : memref<16x96xf32, #tpu.memory_space<vmem>>, vector<16x96xf32>
    tpu.vector_store %arg7[%c0_6, %c0_7], %8 {strides = array<i32>} : memref<16x96xf32, #tpu.memory_space<vmem>>, vector<16x96xf32>,
    %c0_i32_8 = arith.constant 0 : i32
    %10 = arith.cmpi eq, %arg2, %c0_i32_8 : i32
    %11 = arith.extui %10 : i1 to i32
    %c0_i32_9 = arith.constant 0 : i32
    %12 = arith.cmpi ne, %11, %c0_i32_9 : i32
    scf.if %12 {
      %c0_10 = arith.constant 0 : index
      %c0_11 = arith.constant 0 : index
      %13 = vector.load %arg7[%c0_10, %c0_11] : memref<16x96xf32, #tpu.memory_space<vmem>>, vector<16x96xf32>
      %c0_12 = arith.constant 0 : index
      %c0_13 = arith.constant 0 : index
      %14 = vector.load %arg5[%c0_12, %c0_13] : memref<1x96xf32, #tpu.memory_space<vmem>>, vector<1x96xf32>
      %15 = vector.broadcast %14 : vector<1x96xf32> to vector<16x96xf32>
      %16 = arith.addf %13, %15 : vector<16x96xf32>
      %c0_14 = arith.constant 0 : index
      %c0_15 = arith.constant 0 : index
      %17 = vector.load %arg6[%c0_14, %c0_15] : memref<16x96xf32, #tpu.memory_space<vmem>>, vector<16x96xf32>
      tpu.vector_store %arg6[%c0_14, %c0_15], %16 {strides = array<i32>} : memref<16x96xf32, #tpu.memory_space<vmem>>, vector<16x96xf32>,
    } else {
    }
    return
  }
  func.func @transform_0(%arg0: i32, %arg1: i32, %arg2: i32) -> (i32, i32) {
    %c0_i32 = arith.constant 0 : i32
    return %arg0, %arg2 : i32, i32
  }
  func.func @transform_1(%arg0: i32, %arg1: i32, %arg2: i32) -> (i32, i32) {
    %c0_i32 = arith.constant 0 : i32
    return %arg2, %arg1 : i32, i32
  }
  func.func @transform_2(%arg0: i32, %arg1: i32, %arg2: i32) -> (i32, i32) {
    %c0_i32 = arith.constant 0 : i32
    %c0_i32_0 = arith.constant 0 : i32
    return %c0_i32, %arg1 : i32, i32
  }
  func.func @transform_3(%arg0: i32, %arg1: i32, %arg2: i32) -> (i32, i32) {
    %c0_i32 = arith.constant 0 : i32
    return %arg0, %arg1 : i32, i32
  }
}

</mosaic_0001>

<llo_original>
// kernel: tpu_custom_call.1
$region0: #{tpu_custom_call.1}
  #allocation0 [shape = 'u32[]', space=smem, size = 0x4, offset = 0x4, fixed_abs, tag = 'smem constant byte address 0x4 - core index']
  #allocation1 [shape = 'u32[144,128]{1,0:T(1,128)}', space=vmem, size = 0x12000, scoped, tag = 'internal scratch']
  #allocation2 [shape = 'f32[16,96]{1,0:T(8,128)}', space=vmem, size = 0x2000, scoped, tag = 'scratch operand']
  %s0 = inlined_call_operand.hbm [shape: f32[16,32], index: 0, kind: input, shape index: {}]
  %s1 = inlined_call_operand.hbm [shape: bf16[32,96], index: 1, kind: input, shape index: {}]
  %s2 = inlined_call_operand.vmem [shape: f32[1,96], index: 2, kind: input, shape index: {}]
  %s3 = inlined_call_operand.hbm [shape: f32[16,96], index: 3, kind: output, shape index: {}]
  %s4 = sld [smem:[#allocation0]]
  $region38: #{tpu_custom_call.1} parent=0
    _
  %s6 = ssub.s32 1, %s4
  %s7 = scalar_select 0, %s6, %s4
  $region1: #{tpu_custom_call.1} parent=0
    #allocation3 [shape = 'u8[8192]{0}', space=vmem, size = 0x2000, scoped, tag = 'input window, operand 0, single buffered']
    #allocation4 [shape = 's32[1]{0}', space=sflag, size = 0x4, scoped, tag = 'scoped memory for tpu_custom_call.1']
    #allocation5 [shape = 's32[1]{0}', space=sflag, size = 0x4, scoped, tag = 'scoped memory for tpu_custom_call.1']
    #allocation6 [shape = 'u8[8192]{0}', space=vmem, size = 0x2000, scoped, tag = 'input window, operand 1, single buffered']
    #allocation7 [shape = 's32[1]{0}', space=sflag, size = 0x4, scoped, tag = 'scoped memory for tpu_custom_call.1']
    #allocation8 [shape = 'u8[8192]{0}', space=vmem, size = 0x2000, scoped, tag = 'output window, operand 0, single buffered']
    %8 = vsyncpa [#allocation4], 0
    %9 = vsyncpa [#allocation7], 0
    %10 = vsyncpa [#allocation5], 0
    // Predicated region
    $region2: #{tpu_custom_call.1} parent=1 // pred_check
      _
    $region3: #{tpu_custom_call.1} parent=1 // pred_check_branch
      %12 = sbr.rel (0) target = $region5
    $region4: #{tpu_custom_call.1} parent=1 // pred_region
      %s14 = ssub.s32 256, 256
      %15 = vsyncadd [#allocation4], %s14
      %s16 = sshll.u32 [#allocation3], 4
      %s17 = int_to_ptr.vmem [resolvable:$true] %s16
      %22 = dma.hbm_to_vmem [thread:$0]  %s0, 256, %s17, [#allocation4], 128, 128, 8
    $region5: #{tpu_custom_call.1} parent=1 // pred_fallthru
      _
    // Predicated region
    $region6: #{tpu_custom_call.1} parent=1 // pred_check
      _
    $region7: #{tpu_custom_call.1} parent=1 // pred_check_branch
      %24 = sbr.rel (0) target = $region9
    $region8: #{tpu_custom_call.1} parent=1 // pred_region
      %s26 = ssub.s32 256, 256
      %27 = vsyncadd [#allocation7], %s26
      %s28 = sshll.u32 [#allocation6], 4
      %s29 = int_to_ptr.vmem [resolvable:$true] %s28
      %34 = dma.hbm_to_vmem [thread:$0]  %s1, 256, %s29, [#allocation7], 64, 64, 4
    $region9: #{tpu_custom_call.1} parent=1 // pred_fallthru
      _
    // Predicated region
    $region10: #{tpu_custom_call.1} parent=1 // pred_check
      _
    $region11: #{tpu_custom_call.1} parent=1 // pred_check_branch
      %36 = sbr.rel (0) target = $region13
    $region12: #{tpu_custom_call.1} parent=1 // pred_region
      _
    $region13: #{tpu_custom_call.1} parent=1 // pred_fallthru
      _
    // Predicated region
    $region14: #{tpu_custom_call.1} parent=1 // pred_check
      _
    $region15: #{tpu_custom_call.1} parent=1 // pred_check_branch
      %38 = sbr.rel (0) target = $region17
    $region16: #{tpu_custom_call.1} parent=1 // pred_region
      %39 = dma.done [#allocation4], 256
    $region17: #{tpu_custom_call.1} parent=1 // pred_fallthru
      _
    // Predicated region
    $region18: #{tpu_custom_call.1} parent=1 // pred_check
      _
    $region19: #{tpu_custom_call.1} parent=1 // pred_check_branch
      %41 = sbr.rel (0) target = $region21
    $region20: #{tpu_custom_call.1} parent=1 // pred_region
      %42 = dma.done [#allocation7], 256
    $region21: #{tpu_custom_call.1} parent=1 // pred_fallthru
      _
    %p44 = scmp.eq.s32.totalorder 0, 0
    // Predicated region
    $region22: #{tpu_custom_call.1} parent=1 // pred_check
      %p45 = pneg %p44
    $region23: #{tpu_custom_call.1} parent=1 // pred_check_branch
      %47 = sbr.rel (%p45) target = $region25
    $region24: #{tpu_custom_call.1} parent=1 // pred_region
      %vm48 = vcmask 785408
      %49 = vst.msk [vmem:[#allocation2] sm:$0xff] %vm48, 0.0
      %50 = vst.msk [vmem:[#allocation2 + $0x8] sm:$0xff] %vm48, 0.0
    $region25: #{tpu_custom_call.1} parent=1 // pred_fallthru
      _
    %v51 = vld [vmem:[#allocation2] sm:$0xff]
    %v52 = vld [vmem:[#allocation2 + $0x8] sm:$0xff]
    %v53 = vld [vmem:[#allocation3] sm:$0xff]
    %v54 = vld [vmem:[#allocation3 + $0x8] sm:$0xff]
    %v55 = vpack.c.bf16 %v54, %v53
    %v56 = vld [vmem:[#allocation6] sm:$0xf]
    %v57 = vld [vmem:[#allocation6 + $0x4] sm:$0xf]
    %v58 = vld [vmem:[#allocation6 + $0x8] sm:$0xf]
    %v59 = vld [vmem:[#allocation6 + $0xc] sm:$0xf]
    %v64 = vunpack.c.l.b16 %v56
    %v65 = vunpack.c.l.b16 %v57
    %v66 = vunpack.c.l.b16 %v58
    %v67 = vunpack.c.l.b16 %v59
    %v68 = vpack.c.b16 %v65, %v64
    %v69 = vpack.c.b16 %v67, %v66
    %vm72 = vcmask 261120
    %v74 = vsel %vm72, %v55, 0
    %76 = vmatprep.subr.bf16.mxu0 0
    %77 = vmatpush1.bf16.msra.mxu0 0
    %78 = vmatprep.subr.bf16.mxu0 0
    %79 = vmatpush1.bf16.msra.mxu0 0
    %80 = vmatprep.subr.bf16.mxu0 0
    %81 = vmatpush1.bf16.msra.mxu0 0
    %82 = vmatprep.subr.bf16.mxu0 0
    %83 = vmatpush1.bf16.msra.mxu0 0
    %84 = vmatprep.subr.bf16.mxu0 0
    %85 = vmatpush1.bf16.msra.mxu0 0
    %86 = vmatprep.subr.bf16.mxu0 0
    %87 = vmatpush1.bf16.msra.mxu0 0
    %88 = vmatprep.subr.bf16.mxu0 0
    %89 = vmatpush1.bf16.msra.mxu0 %v69
    %90 = vmatprep.subr.bf16.mxu0 0
    %91 = vmatpush1.bf16.msra.mxu0 %v68
    %92 = vmatprep.subr.bf16.mxu0 0
    %93 = vmatpush2.bf16.msra.mxu0 0
    %94 = vmatprep.subr.bf16.mxu0 0
    %95 = vmatpush2.bf16.msra.mxu0 0
    %96 = vmatprep.subr.bf16.mxu0 0
    %97 = vmatpush2.bf16.msra.mxu0 0
    %98 = vmatprep.subr.bf16.mxu0 0
    %99 = vmatpush2.bf16.msra.mxu0 0
    %100 = vmatprep.subr.bf16.mxu0 0
    %101 = vmatpush2.bf16.msra.mxu0 0
    %102 = vmatprep.subr.bf16.mxu0 0
    %103 = vmatpush2.bf16.msra.mxu0 0
    %104 = vmatprep.subr.bf16.mxu0 0
    %105 = vmatpush2.bf16.msra.mxu0 0
    %106 = vmatprep.subr.bf16.mxu0 0
    %107 = vmatpush2.bf16.msra.mxu0 0
    %108 = vmatprep.mubr.bf16.mxu0 0
    %109 = vmatmul.mubr.bf16.gmra.mxu0 %v74
    %v110 = vpop.f32.mrf.mxu0
    %v111 = vadd.f32 0.0, %v110
    %v112 = vpop.f32.mrf.mxu0
    %v113 = vpop.f32.mrf.mxu0
    %v114 = vadd.f32 0.0, %v113
    %v115 = vpop.f32.mrf.mxu0
    %116 = vdwg.mxu0
    %v117 = vadd.f32 %v51, %v111
    %v118 = vadd.f32 %v52, %v114
    %vm119 = vcmask 785408
    %120 = vst.msk [vmem:[#allocation2] sm:$0xff] %vm119, %v117
    %121 = vst.msk [vmem:[#allocation2 + $0x8] sm:$0xff] %vm119, %v118
    // Predicated region
    $region26: #{tpu_custom_call.1} parent=1 // pred_check
      %p122 = pneg %p44
    $region27: #{tpu_custom_call.1} parent=1 // pred_check_branch
      %124 = sbr.rel (%p122) target = $region29
    $region28: #{tpu_custom_call.1} parent=1 // pred_region
      %v125 = vld [vmem:[#allocation2] sm:$0xff]
      %v126 = vld [vmem:[#allocation2 + $0x8] sm:$0xff]
      %v127 = vld [vmem:[%s2] sm:$0x1]
      %v129 = vlaneseq
      %v130 = vshrl.u32 %v129, 7
      %v131 = vsub.s32 0, %v130
      %v132 = vrot.slane %v127, %v131
      %v134 = vadd.f32 %v125, %v132
      %v135 = vadd.f32 %v126, %v132
      %136 = vst.msk [vmem:[#allocation8] sm:$0xff] %vm119, %v134
      %137 = vst.msk [vmem:[#allocation8 + $0x8] sm:$0xff] %vm119, %v135
    $region29: #{tpu_custom_call.1} parent=1 // pred_fallthru
      _
    // Predicated region
    $region30: #{tpu_custom_call.1} parent=1 // pred_check
      _
    $region31: #{tpu_custom_call.1} parent=1 // pred_check_branch
      %139 = sbr.rel (0) target = $region33
    $region32: #{tpu_custom_call.1} parent=1 // pred_region
      %s141 = ssub.s32 256, 256
      %142 = vsyncadd [#allocation5], %s141
      %s143 = sshll.u32 [#allocation8], 4
      %s144 = int_to_ptr.vmem [resolvable:$true] %s143
      %149 = dma.vmem_to_hbm [thread:$0]  %s144, 256, %s3, [#allocation5], 128, 128, 8
    $region33: #{tpu_custom_call.1} parent=1 // pred_fallthru
      _
    // Predicated region
    $region34: #{tpu_custom_call.1} parent=1 // pred_check
      _
    $region35: #{tpu_custom_call.1} parent=1 // pred_check_branch
      %151 = sbr.rel (0) target = $region37
    $region36: #{tpu_custom_call.1} parent=1 // pred_region
      %152 = dma.done [#allocation5], 256
    $region37: #{tpu_custom_call.1} parent=1 // pred_fallthru
      _
    %153 = vsyncpa [#allocation4], 1
    %154 = vsyncpa [#allocation7], 1
    %155 = vsyncpa [#allocation5], 1

</llo_original>
